<compile_context>
chip_gen: v7x
topology: tpu7x:2x2x1
jax: 0.10.0
libtpu: 0.0.40
codegen_flags: <defaults>
</compile_context>

<pallas_src>
import functools

import jax
import jax.numpy as jnp
from jax import lax
from jax.experimental import pallas as pl
from jax.experimental.pallas import tpu as pltpu

LANE = 128
SUBLANE = 8
_DEF_CHUNK_ROWS = 512            # 512*128*4 B = 256 KiB per streamed operand


def _round_up(x, m):
    return (x + m - 1) // m * m


def _vmem_capacity_bytes():
    """Physical VMEM per TensorCore; conservative fallback if unqueryable."""
    try:
        info = pltpu.get_tpu_info()
        for attr in ("vmem_capacity_bytes", "vmem_size_bytes", "vmem_bytes"):
            v = getattr(info, attr, None)
            if v:
                return int(v)
    except Exception:
        pass
    return 64 << 20                          # v7x per-core VMEM (smallest)


def _solve_scale_shift(a00, a01, a11, b0, b1):
    det = a00 * a11 - a01 * a01
    ok = det != 0.0
    safe = jnp.where(ok, det, 1.0)
    scale = jnp.where(ok, (a11 * b0 - a01 * b1) / safe, 0.0)
    shift = jnp.where(ok, (-a01 * b0 + a00 * b1) / safe, 0.0)
    return scale, shift


def _fold(x):
    """(R,128) -> (8,128) partial sums with VPU adds only (defers the XLU)."""
    r = x.shape[0]
    return jnp.sum(x.reshape(r // SUBLANE, SUBLANE, LANE), axis=0)


def _masked_terms(pred, targ, valid):
    mp = jnp.where(valid, pred, 0.0)               # mask * prediction
    td = jnp.where(valid, 1.0 / targ, 0.0)         # masked 1/target (1/0=inf dropped)
    one = jnp.where(valid, 1.0, 0.0)
    return mp, td, one


def _accum_sums(pred_ref, targ_ref, acc_ref, *, chunk, n_chunks, valid_rows=None):
    """acc_ref[(5,8,128)] += masked partial sums over n_chunks row chunks."""
    if n_chunks == 0:
        return

    @pl.loop(0, n_chunks)
    def _(c):
        r0 = pl.multiple_of(c * chunk, chunk)
        p = pred_ref[0, pl.ds(r0, chunk), :]
        g = targ_ref[0, pl.ds(r0, chunk), :]
        valid = g > 0.0
        if valid_rows is not None:           # ragged tail / fully OOB clamped tile
            rows = lax.broadcasted_iota(jnp.int32, (chunk, LANE), 0)
            valid = jnp.logical_and(valid, rows < (valid_rows - r0))
        mp, td, one = _masked_terms(p, g, valid)
        acc_ref[0] += _fold(mp * mp)         # a00  (mask*p*p == (mask*p)^2)
        acc_ref[1] += _fold(mp)              # a01
        acc_ref[2] += _fold(one)             # a11
        acc_ref[3] += _fold(mp * td)         # b0
        acc_ref[4] += _fold(td)              # b1


def _apply_rows(pred_ref, out_ref, scale, shift, disparity_cap, chunk):
    """out = 1 / max(scale*pred + shift, cap), streamed in row chunks."""
    rows = pred_ref.shape[1]
    n_chunks = rows // chunk
    rem = rows - n_chunks * chunk

    def one_chunk(r0, nrows):
        p = pred_ref[0, pl.ds(r0, nrows), :]
        out_ref[0, pl.ds(r0, nrows), :] = 1.0 / jnp.maximum(
            scale * p + shift, disparity_cap)

    if n_chunks:
        @pl.loop(0, n_chunks)
        def _(c):
            one_chunk(pl.multiple_of(c * chunk, chunk), chunk)
    if rem:
        one_chunk(n_chunks * chunk, rem)


# ----------------------------- fused (small/medium images) -------------------

def _fused_kernel(pred_ref, targ_ref, out_ref, acc_ref, *, disparity_cap, chunk):
    rows = pred_ref.shape[1]
    n_chunks = rows // chunk
    rem = rows - n_chunks * chunk

    acc_ref[...] = jnp.zeros_like(acc_ref)
    _accum_sums(pred_ref, targ_ref, acc_ref, chunk=chunk, n_chunks=n_chunks)
    a00 = jnp.sum(acc_ref[0])
    a01 = jnp.sum(acc_ref[1])
    a11 = jnp.sum(acc_ref[2])
    b0 = jnp.sum(acc_ref[3])
    b1 = jnp.sum(acc_ref[4])
    if rem:                                   # statically-shaped tail (< chunk rows)
        off = n_chunks * chunk
        p = pred_ref[0, pl.ds(off, rem), :]
        g = targ_ref[0, pl.ds(off, rem), :]
        mp, td, one = _masked_terms(p, g, g > 0.0)
        a00 += jnp.sum(mp * mp)
        a01 += jnp.sum(mp)
        a11 += jnp.sum(one)
        b0 += jnp.sum(mp * td)
        b1 += jnp.sum(td)

    scale, shift = _solve_scale_shift(a00, a01, a11, b0, b1)
    _apply_rows(pred_ref, out_ref, scale, shift, disparity_cap, chunk)


# ----------------------------- two-phase (large images) ----------------------

def _reduce_kernel(pred_ref, targ_ref, part_ref, acc_ref, *,
                   full_rows, tile_rows, tiles_per_split, chunk, ragged):
    s = pl.program_id(1)
    t = pl.program_id(2)

    @pl.when(t == 0)
    def _init():
        acc_ref[...] = jnp.zeros_like(acc_ref)

    valid_rows = None
    if ragged:   # rows past the array end (partial / clamped tiles) are masked out
        valid_rows = full_rows - (s * tiles_per_split + t) * tile_rows
    _accum_sums(pred_ref, targ_ref, acc_ref,
                chunk=chunk, n_chunks=tile_rows // chunk, valid_rows=valid_rows)

    @pl.when(t == tiles_per_split - 1)
    def _finalize():
        part_ref[0] = acc_ref[...]


def _apply_kernel(scale_ref, shift_ref, pred_ref, out_ref, *, disparity_cap, chunk):
    b = pl.program_id(0)
    _apply_rows(pred_ref, out_ref, scale_ref[b], shift_ref[b], disparity_cap, chunk)


# --------------------------------- wrapper -----------------------------------

def disp_to_depth(prediction, target, depth_cap, *,
                  max_tile_rows=None, chunk_rows=_DEF_CHUNK_ROWS,
                  fused_vmem_budget=None):
    """prediction, target: (B, H, W) -> capped depth (B, H, W) float32."""
    assert prediction.shape == target.shape and prediction.ndim == 3
    B, H, W = prediction.shape
    n = H * W
    disparity_cap = 1.0 / float(depth_cap)

    vmem_cap = _vmem_capacity_bytes()
    if max_tile_rows is None:                 # 8 MiB tiles on 128-MiB parts, 4 MiB on v7x
        max_tile_rows = 16384 if vmem_cap >= (96 << 20) else 8192
    if fused_vmem_budget is None:             # ~104 MiB on v5e/v6e, ~40 MiB on v7x
        fused_vmem_budget = max(vmem_cap - (24 << 20), 8 << 20)
    hard_cap = vmem_cap - (2 << 20)

    pred = prediction.astype(jnp.float32).reshape(B, n)
    targ = target.astype(jnp.float32).reshape(B, n)

    # Lane-dense layout (B, rows, 128).  Only pad (one copy) when H*W is not a
    # multiple of 128; padded target pixels are 0 -> excluded by the mask.
    n128 = _round_up(n, LANE)
    if n128 != n:
        pad = ((0, 0), (0, n128 - n))
        pred = jnp.pad(pred, pad)
        targ = jnp.pad(targ, pad)
    full_rows = n128 // LANE
    pred3 = pred.reshape(B, full_rows, LANE)
    targ3 = targ.reshape(B, full_rows, LANE)

    image_bytes = full_rows * LANE * 4
    chunk = max(SUBLANE, (min(chunk_rows, max_tile_rows) // SUBLANE) * SUBLANE)
    tiny = full_rows < 2 * SUBLANE

    if B == 1 and (tiny or 3 * image_bytes <= fused_vmem_budget):
        # One grid step: grid-less call -> whole image single-buffered in VMEM.
        out3 = pl.pallas_call(
            functools.partial(_fused_kernel, disparity_cap=disparity_cap, chunk=chunk),
            out_shape=jax.ShapeDtypeStruct((B, full_rows, LANE), jnp.float32),
            scratch_shapes=[pltpu.VMEM((5, SUBLANE, LANE), jnp.float32)],
            compiler_params=pltpu.CompilerParams(
                vmem_limit_bytes=min(hard_cap, 3 * image_bytes + (16 << 20))),
        )(pred3, targ3)
    elif tiny or 6 * image_bytes <= fused_vmem_budget:
        spec = pl.BlockSpec((1, full_rows, LANE), lambda b: (b, 0, 0))
        out3 = pl.pallas_call(
            functools.partial(_fused_kernel, disparity_cap=disparity_cap, chunk=chunk),
            out_shape=jax.ShapeDtypeStruct((B, full_rows, LANE), jnp.float32),
            grid=(B,),
            in_specs=[spec, spec],
            out_specs=spec,
            scratch_shapes=[pltpu.VMEM((5, SUBLANE, LANE), jnp.float32)],
            compiler_params=pltpu.CompilerParams(
                dimension_semantics=("parallel",),
                vmem_limit_bytes=min(hard_cap, 6 * image_bytes + (16 << 20))),
        )(pred3, targ3)
    else:
        # ----- phase 1: per-image partial sums -> (B*S, 5, 8, 128) -----
        S = 2 if B == 1 else 1        # give both TensorCores work at B == 1
        rows_cap = max(SUBLANE, min((max_tile_rows // SUBLANE) * SUBLANE,
                                    (full_rows // SUBLANE) * SUBLANE))
        chunk = min(chunk, rows_cap)
        nt = _round_up(max(pl.cdiv(full_rows, rows_cap), S), S)
        tile_rows = _round_up(pl.cdiv(full_rows, nt), chunk)
        if tile_rows > rows_cap:
            tile_rows = (rows_cap // chunk) * chunk
        tiles_per_split = nt // S
        num_tiles = pl.cdiv(full_rows, tile_rows)
        ragged = (nt * tile_rows != full_rows)
        last_tile = num_tiles - 1

        def in_map(b, s, t):
            # Clamp fully out-of-range tiles to the last real tile; the
            # in-kernel row mask zeroes their contribution.
            return (b, jnp.minimum(s * tiles_per_split + t, last_tile), 0)

        tile_bytes = tile_rows * LANE * 4
        part = pl.pallas_call(
            functools.partial(
                _reduce_kernel, full_rows=full_rows, tile_rows=tile_rows,
                tiles_per_split=tiles_per_split, chunk=chunk, ragged=ragged),
            out_shape=jax.ShapeDtypeStruct((B * S, 5, SUBLANE, LANE), jnp.float32),
            grid=(B, S, tiles_per_split),
            in_specs=[pl.BlockSpec((1, tile_rows, LANE), in_map),
                      pl.BlockSpec((1, tile_rows, LANE), in_map)],
            out_specs=pl.BlockSpec((1, 5, SUBLANE, LANE),
                                   lambda b, s, t: (b * S + s, 0, 0, 0)),
            scratch_shapes=[pltpu.VMEM((5, SUBLANE, LANE), jnp.float32)],
            compiler_params=pltpu.CompilerParams(
                dimension_semantics=("parallel", "parallel", "arbitrary"),
                vmem_limit_bytes=min(hard_cap, 4 * tile_bytes + (16 << 20))),
        )(pred3, targ3)

        # Tiny host-side combine + 2x2 solve (a few KB of traffic).
        sums = part.reshape(B, S, 5, SUBLANE, LANE).sum(axis=(1, 3, 4))  # (B, 5)
        scale, shift = _solve_scale_shift(
            sums[:, 0], sums[:, 1], sums[:, 2], sums[:, 3], sums[:, 4])

        # ----- phase 2: elementwise align / cap / invert, fully parallel -----
        nt2 = pl.cdiv(full_rows, rows_cap)
        tile2_rows = _round_up(pl.cdiv(full_rows, nt2), chunk)
        if tile2_rows > rows_cap:
            tile2_rows = (rows_cap // chunk) * chunk
        num_tiles2 = pl.cdiv(full_rows, tile2_rows)
        tile2_bytes = tile2_rows * LANE * 4
        img2_spec = pl.BlockSpec((1, tile2_rows, LANE), lambda b, t: (b, t, 0))
        # TODO(synk): alias pred3 -> out (input_output_aliases) once callers are
        # known to donate it; aliasing a non-donated entry param inserts a copy.
        out3 = pl.pallas_call(
            functools.partial(_apply_kernel, disparity_cap=disparity_cap, chunk=chunk),
            out_shape=jax.ShapeDtypeStruct((B, full_rows, LANE), jnp.float32),
            grid=(B, num_tiles2),
            in_specs=[pl.BlockSpec(memory_space=pltpu.MemorySpace.SMEM),
                      pl.BlockSpec(memory_space=pltpu.MemorySpace.SMEM),
                      img2_spec],
            out_specs=img2_spec,
            compiler_params=pltpu.CompilerParams(
                dimension_semantics=("parallel", "parallel"),
                vmem_limit_bytes=min(hard_cap, 4 * tile2_bytes + (16 << 20))),
        )(scale, shift, pred3)

    depth = out3.reshape(B, n128)
    if n128 != n:
        depth = depth[:, :n]
    return depth.reshape(B, H, W)


# -------------------------------- reference -----------------------------------

def _reference(prediction, target, depth_cap):
    """Pure-JAX reference mirroring the PyTorch forward, for validation."""
    valid = target > 0.0
    mask = valid.astype(jnp.float32)
    td = jnp.where(valid, 1.0 / jnp.where(valid, target, 1.0), 0.0)
    a00 = jnp.sum(mask * prediction * prediction, axis=(1, 2))
    a01 = jnp.sum(mask * prediction, axis=(1, 2))
    a11 = jnp.sum(mask, axis=(1, 2))
    b0 = jnp.sum(mask * prediction * td, axis=(1, 2))
    b1 = jnp.sum(mask * td, axis=(1, 2))
    det = a00 * a11 - a01 * a01
    ok = det != 0.0
    sd = jnp.where(ok, det, 1.0)
    scale = jnp.where(ok, (a11 * b0 - a01 * b1) / sd, 0.0)
    shift = jnp.where(ok, (-a01 * b0 + a00 * b1) / sd, 0.0)
    aligned = jnp.maximum(scale[:, None, None] * prediction + shift[:, None, None],
                          1.0 / depth_cap)
    return 1.0 / aligned


if __name__ == "__main__":
    # The module has no learned weights; its only parameter is the depth cap.
    DEPTH_CAP = 80
    key = jax.random.PRNGKey(0)

    def make_inputs(k, shape):
        kp, kd, km = jax.random.split(k, 3)
        pred = jax.random.uniform(kp, shape, jnp.float32, minval=0.01, maxval=1.0)
        depth = jax.random.uniform(kd, shape, jnp.float32, minval=1.0, maxval=50.0)
        keep = jax.random.uniform(km, shape) > 0.2      # ~20% invalid (zero) pixels
        return pred, jnp.where(keep, depth, 0.0)

    k1, k2, k3, k4 = jax.random.split(key, 4)

    # 1) fused, gridded over batch; H*W a multiple of 128 (zero-copy layout).
    p, t = make_inputs(k1, (2, 32, 32))
    out = jax.block_until_ready(disp_to_depth(p, t, DEPTH_CAP))
    ref = _reference(p, t, DEPTH_CAP)
    assert out.shape == p.shape
    assert jnp.allclose(out, ref, rtol=2e-3, atol=2e-3), "fused (gridded) mismatch"

    # 2) fused, B == 1 grid-less single-buffer path; ragged lane count (24*40).
    p, t = make_inputs(k2, (1, 24, 40))
    out = jax.block_until_ready(disp_to_depth(p, t, DEPTH_CAP))
    ref = _reference(p, t, DEPTH_CAP)
    assert out.shape == p.shape
    assert jnp.allclose(out, ref, rtol=2e-3, atol=2e-3), "fused (B=1) mismatch"

    # 3) two-phase tiled path, B == 1: exercises the parallel tile-axis split,
    #    ragged row tiles and fully-out-of-range (clamped) tiles.
    p, t = make_inputs(k3, (1, 64, 72))
    out = jax.block_until_ready(
        disp_to_depth(p, t, DEPTH_CAP,
                      fused_vmem_budget=0, max_tile_rows=8, chunk_rows=8))
    ref = _reference(p, t, DEPTH_CAP)
    assert out.shape == p.shape
    assert jnp.allclose(out, ref, rtol=2e-3, atol=2e-3), "tiled (B=1) mismatch"

    # 4) two-phase tiled path, B == 2 with a lane pad (40*50 % 128 != 0).
    p, t = make_inputs(k4, (2, 40, 50))
    out = jax.block_until_ready(
        disp_to_depth(p, t, DEPTH_CAP,
                      fused_vmem_budget=0, max_tile_rows=8, chunk_rows=8))
    ref = _reference(p, t, DEPTH_CAP)
    assert out.shape == p.shape
    assert jnp.allclose(out, ref, rtol=2e-3, atol=2e-3), "tiled (B=2) mismatch"

    print("KERNEL_OK")
</pallas_src>

<mosaic_0001>
module attributes {stable_mosaic.version = 11 : i64} {
  func.func @_fused_kernel(%arg0: i32, %arg1: memref<1x8x128xf32, #tpu.memory_space<vmem>>, %arg2: memref<1x8x128xf32, #tpu.memory_space<vmem>>, %arg3: memref<1x8x128xf32, #tpu.memory_space<vmem>>, %arg4: memref<5x8x128xf32, #tpu.memory_space<vmem>>) attributes {dimension_semantics = [#tpu.dimension_semantics<parallel>], iteration_bounds = array<i64: 2>, scalar_prefetch = 0 : i64, scratch_operands = 1 : i64, tpu.core_type = #tpu.core_type<tc>, window_params = [{transform_indices = @transform_0, window_bounds = array<i64: 1, 8, 128>}, {transform_indices = @transform_1, window_bounds = array<i64: 1, 8, 128>}, {transform_indices = @transform_2, window_bounds = array<i64: 1, 8, 128>}]} {
    %cst = arith.constant 0.000000e+00 : f32
    %0 = vector.broadcast %cst : f32 to vector<5x8x128xf32>
    %c0 = arith.constant 0 : index
    %c0_0 = arith.constant 0 : index
    %c0_1 = arith.constant 0 : index
    %1 = vector.load %arg4[%c0, %c0_0, %c0_1] : memref<5x8x128xf32, #tpu.memory_space<vmem>>, vector<5x8x128xf32>
    tpu.vector_store %arg4[%c0, %c0_0, %c0_1], %0 {strides = array<i32>} : memref<5x8x128xf32, #tpu.memory_space<vmem>>, vector<5x8x128xf32>,
    %c0_2 = arith.constant 0 : index
    %c0_3 = arith.constant 0 : index
    %c0_4 = arith.constant 0 : index
    %2 = vector.load %arg4[%c0_2, %c0_3, %c0_4] : memref<5x8x128xf32, #tpu.memory_space<vmem>>, vector<1x8x128xf32>
    %3 = vector.shape_cast %2 : vector<1x8x128xf32> to vector<8x128xf32>
    %4 = vector.shape_cast %3 : vector<8x128xf32> to vector<1x8x128xf32>
    %cst_5 = arith.constant dense<0.000000e+00> : vector<1xf32>
    %5 = vector.multi_reduction <add>, %4, %cst_5 [1, 2] : vector<1x8x128xf32> to vector<1xf32>
    %6 = vector.shape_cast %5 : vector<1xf32> to vector<1x1x1xf32>
    %7 = vector.extract %6[0, 0, 0] : f32 from vector<1x1x1xf32>
    %c1 = arith.constant 1 : index
    %c0_6 = arith.constant 0 : index
    %c0_7 = arith.constant 0 : index
    %8 = vector.load %arg4[%c1, %c0_6, %c0_7] : memref<5x8x128xf32, #tpu.memory_space<vmem>>, vector<1x8x128xf32>
    %9 = vector.shape_cast %8 : vector<1x8x128xf32> to vector<8x128xf32>
    %10 = vector.shape_cast %9 : vector<8x128xf32> to vector<1x8x128xf32>
    %cst_8 = arith.constant dense<0.000000e+00> : vector<1xf32>
    %11 = vector.multi_reduction <add>, %10, %cst_8 [1, 2] : vector<1x8x128xf32> to vector<1xf32>
    %12 = vector.shape_cast %11 : vector<1xf32> to vector<1x1x1xf32>
    %13 = vector.extract %12[0, 0, 0] : f32 from vector<1x1x1xf32>
    %c2 = arith.constant 2 : index
    %c0_9 = arith.constant 0 : index
    %c0_10 = arith.constant 0 : index
    %14 = vector.load %arg4[%c2, %c0_9, %c0_10] : memref<5x8x128xf32, #tpu.memory_space<vmem>>, vector<1x8x128xf32>
    %15 = vector.shape_cast %14 : vector<1x8x128xf32> to vector<8x128xf32>
    %16 = vector.shape_cast %15 : vector<8x128xf32> to vector<1x8x128xf32>
    %cst_11 = arith.constant dense<0.000000e+00> : vector<1xf32>
    %17 = vector.multi_reduction <add>, %16, %cst_11 [1, 2] : vector<1x8x128xf32> to vector<1xf32>
    %18 = vector.shape_cast %17 : vector<1xf32> to vector<1x1x1xf32>
    %19 = vector.extract %18[0, 0, 0] : f32 from vector<1x1x1xf32>
    %c3 = arith.constant 3 : index
    %c0_12 = arith.constant 0 : index
    %c0_13 = arith.constant 0 : index
    %20 = vector.load %arg4[%c3, %c0_12, %c0_13] : memref<5x8x128xf32, #tpu.memory_space<vmem>>, vector<1x8x128xf32>
    %21 = vector.shape_cast %20 : vector<1x8x128xf32> to vector<8x128xf32>
    %22 = vector.shape_cast %21 : vector<8x128xf32> to vector<1x8x128xf32>
    %cst_14 = arith.constant dense<0.000000e+00> : vector<1xf32>
    %23 = vector.multi_reduction <add>, %22, %cst_14 [1, 2] : vector<1x8x128xf32> to vector<1xf32>
    %24 = vector.shape_cast %23 : vector<1xf32> to vector<1x1x1xf32>
    %25 = vector.extract %24[0, 0, 0] : f32 from vector<1x1x1xf32>
    %c4 = arith.constant 4 : index
    %c0_15 = arith.constant 0 : index
    %c0_16 = arith.constant 0 : index
    %26 = vector.load %arg4[%c4, %c0_15, %c0_16] : memref<5x8x128xf32, #tpu.memory_space<vmem>>, vector<1x8x128xf32>
    %27 = vector.shape_cast %26 : vector<1x8x128xf32> to vector<8x128xf32>
    %28 = vector.shape_cast %27 : vector<8x128xf32> to vector<1x8x128xf32>
    %cst_17 = arith.constant dense<0.000000e+00> : vector<1xf32>
    %29 = vector.multi_reduction <add>, %28, %cst_17 [1, 2] : vector<1x8x128xf32> to vector<1xf32>
    %30 = vector.shape_cast %29 : vector<1xf32> to vector<1x1x1xf32>
    %31 = vector.extract %30[0, 0, 0] : f32 from vector<1x1x1xf32>
    %c0_18 = arith.constant 0 : index
    %c0_19 = arith.constant 0 : index
    %c0_20 = arith.constant 0 : index
    %32 = vector.load %arg1[%c0_18, %c0_19, %c0_20] : memref<1x8x128xf32, #tpu.memory_space<vmem>>, vector<1x8x128xf32>
    %33 = vector.shape_cast %32 : vector<1x8x128xf32> to vector<8x128xf32>
    %c0_21 = arith.constant 0 : index
    %c0_22 = arith.constant 0 : index
    %c0_23 = arith.constant 0 : index
    %34 = vector.load %arg2[%c0_21, %c0_22, %c0_23] : memref<1x8x128xf32, #tpu.memory_space<vmem>>, vector<1x8x128xf32>
    %35 = vector.shape_cast %34 : vector<1x8x128xf32> to vector<8x128xf32>
    %cst_24 = arith.constant 0.000000e+00 : f32
    %36 = vector.broadcast %cst_24 : f32 to vector<8x128xf32>
    %37 = arith.cmpf ogt, %35, %36 : vector<8x128xf32>
    %cst_25 = arith.constant 0.000000e+00 : f32
    %38 = vector.broadcast %cst_25 : f32 to vector<8x128xf32>
    %39 = arith.select %37, %33, %38 : vector<8x128xi1>, vector<8x128xf32>
    %cst_26 = arith.constant 1.000000e+00 : f32
    %40 = vector.broadcast %cst_26 : f32 to vector<8x128xf32>
    %41 = arith.divf %40, %35 : vector<8x128xf32>
    %cst_27 = arith.constant 0.000000e+00 : f32
    %42 = vector.broadcast %cst_27 : f32 to vector<8x128xf32>
    %43 = arith.select %37, %41, %42 : vector<8x128xi1>, vector<8x128xf32>
    %cst_28 = arith.constant 1.000000e+00 : f32
    %cst_29 = arith.constant 0.000000e+00 : f32
    %44 = vector.broadcast %cst_28 : f32 to vector<8x128xf32>
    %45 = vector.broadcast %cst_29 : f32 to vector<8x128xf32>
    %46 = arith.select %37, %44, %45 : vector<8x128xi1>, vector<8x128xf32>
    %47 = arith.mulf %39, %39 : vector<8x128xf32>
    %48 = vector.shape_cast %47 : vector<8x128xf32> to vector<1x8x128xf32>
    %cst_30 = arith.constant dense<0.000000e+00> : vector<1xf32>
    %49 = vector.multi_reduction <add>, %48, %cst_30 [1, 2] : vector<1x8x128xf32> to vector<1xf32>
    %50 = vector.shape_cast %49 : vector<1xf32> to vector<1x1x1xf32>
    %51 = vector.extract %50[0, 0, 0] : f32 from vector<1x1x1xf32>
    %52 = arith.addf %7, %51 : f32
    %53 = vector.shape_cast %39 : vector<8x128xf32> to vector<1x8x128xf32>
    %cst_31 = arith.constant dense<0.000000e+00> : vector<1xf32>
    %54 = vector.multi_reduction <add>, %53, %cst_31 [1, 2] : vector<1x8x128xf32> to vector<1xf32>
    %55 = vector.shape_cast %54 : vector<1xf32> to vector<1x1x1xf32>
    %56 = vector.extract %55[0, 0, 0] : f32 from vector<1x1x1xf32>
    %57 = arith.addf %13, %56 : f32
    %58 = vector.shape_cast %46 : vector<8x128xf32> to vector<1x8x128xf32>
    %cst_32 = arith.constant dense<0.000000e+00> : vector<1xf32>
    %59 = vector.multi_reduction <add>, %58, %cst_32 [1, 2] : vector<1x8x128xf32> to vector<1xf32>
    %60 = vector.shape_cast %59 : vector<1xf32> to vector<1x1x1xf32>
    %61 = vector.extract %60[0, 0, 0] : f32 from vector<1x1x1xf32>
    %62 = arith.addf %19, %61 : f32
    %63 = arith.mulf %39, %43 : vector<8x128xf32>
    %64 = vector.shape_cast %63 : vector<8x128xf32> to vector<1x8x128xf32>
    %cst_33 = arith.constant dense<0.000000e+00> : vector<1xf32>
    %65 = vector.multi_reduction <add>, %64, %cst_33 [1, 2] : vector<1x8x128xf32> to vector<1xf32>
    %66 = vector.shape_cast %65 : vector<1xf32> to vector<1x1x1xf32>
    %67 = vector.extract %66[0, 0, 0] : f32 from vector<1x1x1xf32>
    %68 = arith.addf %25, %67 : f32
    %69 = vector.shape_cast %43 : vector<8x128xf32> to vector<1x8x128xf32>
    %cst_34 = arith.constant dense<0.000000e+00> : vector<1xf32>
    %70 = vector.multi_reduction <add>, %69, %cst_34 [1, 2] : vector<1x8x128xf32> to vector<1xf32>
    %71 = vector.shape_cast %70 : vector<1xf32> to vector<1x1x1xf32>
    %72 = vector.extract %71[0, 0, 0] : f32 from vector<1x1x1xf32>
    %73 = arith.addf %31, %72 : f32
    %74 = arith.mulf %52, %62 : f32
    %75 = arith.mulf %57, %57 : f32
    %76 = arith.subf %74, %75 : f32
    %cst_35 = arith.constant 0.000000e+00 : f32
    %77 = arith.cmpf one, %76, %cst_35 : f32
    %cst_36 = arith.constant 1.000000e+00 : f32
    %78 = arith.select %77, %76, %cst_36 : f32
    %79 = arith.mulf %62, %68 : f32
    %80 = arith.mulf %57, %73 : f32
    %81 = arith.subf %79, %80 : f32
    %82 = arith.divf %81, %78 : f32
    %cst_37 = arith.constant 0.000000e+00 : f32
    %83 = arith.select %77, %82, %cst_37 : f32
    %cst_38 = arith.constant 0.000000e+00 : f32
    %84 = arith.subf %cst_38, %57 : f32
    %85 = arith.mulf %84, %68 : f32
    %86 = arith.mulf %52, %73 : f32
    %87 = arith.addf %85, %86 : f32
    %88 = arith.divf %87, %78 : f32
    %cst_39 = arith.constant 0.000000e+00 : f32
    %89 = arith.select %77, %88, %cst_39 : f32
    %c0_40 = arith.constant 0 : index
    %c0_41 = arith.constant 0 : index
    %c0_42 = arith.constant 0 : index
    %90 = vector.load %arg1[%c0_40, %c0_41, %c0_42] : memref<1x8x128xf32, #tpu.memory_space<vmem>>, vector<1x8x128xf32>
    %91 = vector.shape_cast %90 : vector<1x8x128xf32> to vector<8x128xf32>
    %92 = vector.broadcast %83 : f32 to vector<8x128xf32>
    %93 = arith.mulf %92, %91 : vector<8x128xf32>
    %94 = vector.broadcast %89 : f32 to vector<8x128xf32>
    %95 = arith.addf %93, %94 : vector<8x128xf32>
    %cst_43 = arith.constant 1.250000e-02 : f32
    %96 = vector.broadcast %cst_43 : f32 to vector<8x128xf32>
    %97 = arith.maximumf %95, %96 : vector<8x128xf32>
    %cst_44 = arith.constant 1.000000e+00 : f32
    %98 = vector.broadcast %cst_44 : f32 to vector<8x128xf32>
    %99 = arith.divf %98, %97 : vector<8x128xf32>
    %c0_45 = arith.constant 0 : index
    %c0_46 = arith.constant 0 : index
    %c0_47 = arith.constant 0 : index
    %100 = vector.load %arg3[%c0_45, %c0_46, %c0_47] : memref<1x8x128xf32, #tpu.memory_space<vmem>>, vector<1x8x128xf32>
    %101 = vector.shape_cast %100 : vector<1x8x128xf32> to vector<8x128xf32>
    %102 = vector.shape_cast %99 : vector<8x128xf32> to vector<1x8x128xf32>
    tpu.vector_store %arg3[%c0_45, %c0_46, %c0_47], %102 {strides = array<i32>} : memref<1x8x128xf32, #tpu.memory_space<vmem>>, vector<1x8x128xf32>,
    return
  }
  func.func @transform_0(%arg0: i32) -> (i32, i32, i32) {
    %c0_i32 = arith.constant 0 : i32
    %c0_i32_0 = arith.constant 0 : i32
    %c0_i32_1 = arith.constant 0 : i32
    return %arg0, %c0_i32, %c0_i32_0 : i32, i32, i32
  }
  func.func @transform_1(%arg0: i32) -> (i32, i32, i32) {
    %c0_i32 = arith.constant 0 : i32
    %c0_i32_0 = arith.constant 0 : i32
    %c0_i32_1 = arith.constant 0 : i32
    return %arg0, %c0_i32, %c0_i32_0 : i32, i32, i32
  }
  func.func @transform_2(%arg0: i32) -> (i32, i32, i32) {
    %c0_i32 = arith.constant 0 : i32
    %c0_i32_0 = arith.constant 0 : i32
    %c0_i32_1 = arith.constant 0 : i32
    return %arg0, %c0_i32, %c0_i32_0 : i32, i32, i32
  }
}

</mosaic_0001>

<llo_original>
// kernel: tpu_custom_call.1
$region0: #{tpu_custom_call.1}
  #allocation0 [shape = 'u32[]', space=smem, size = 0x4, offset = 0x4, fixed_abs, tag = 'smem constant byte address 0x4 - core index']
  #allocation1 [shape = 'u32[144,128]{1,0:T(1,128)}', space=vmem, size = 0x12000, scoped, tag = 'internal scratch']
  #allocation2 [shape = 'f32[5,8,128]{2,1,0:T(8,128)}', space=vmem, size = 0x5000, scoped, tag = 'scratch operand']
  %s0 = inlined_call_operand.hbm [shape: f32[2,8,128], index: 0, kind: input, shape index: {}]
  %s1 = inlined_call_operand.hbm [shape: f32[2,8,128], index: 1, kind: input, shape index: {}]
  %s2 = inlined_call_operand.hbm [shape: f32[2,8,128], index: 2, kind: output, shape index: {}]
  %s3 = sld [smem:[#allocation0]]
  $region49: #{tpu_custom_call.1} parent=0
    _
  %s5 = ssub.s32 1, %s3
  %s6 = scalar_select 0, %s5, %s3
  $region1: #{tpu_custom_call.1} parent=0
    #allocation3 [shape = 'u8[8192]{0}', space=vmem, size = 0x2000, scoped, tag = 'input window, operand 0']
    #allocation4 [shape = 's32[2]{0}', space=sflag, size = 0x8, scoped, tag = 'scoped memory for tpu_custom_call.1']
    #allocation5 [shape = 's32[2]{0}', space=sflag, size = 0x8, scoped, tag = 'scoped memory for tpu_custom_call.1']
    #allocation6 [shape = 'u8[8192]{0}', space=vmem, size = 0x2000, scoped, tag = 'input window, operand 1']
    #allocation7 [shape = 's32[2]{0}', space=sflag, size = 0x8, scoped, tag = 'scoped memory for tpu_custom_call.1']
    #allocation8 [shape = 'u8[8192]{0}', space=vmem, size = 0x2000, scoped, tag = 'output window, operand 0']
    %7 = vsyncpa [#allocation4], 0
    %s8 = scalar_lea.sflag [#allocation4], 1
    %9 = vsyncpa %s8, 0
    %10 = vsyncpa [#allocation7], 0
    %s11 = scalar_lea.sflag [#allocation7], 1
    %12 = vsyncpa %s11, 0
    %13 = vsyncpa [#allocation5], 0
    %s14 = scalar_lea.sflag [#allocation5], 1
    %15 = vsyncpa %s14, 0
    loop: start=0, step=1, limit=4
    $region2: #{tpu_custom_call.1} parent=1 // loop_pre_header
      _
    $region3: #{tpu_custom_call.1} parent=1 // loop_header
      %s17 = sphi 0, %s21
      %p18 = scmp.ge.s32.totalorder %s17, 4
      %s27 = sphi 0, %s29
      %s30 = sphi 0, %s27
      %s31 = sphi 0, %s30
      %s47 = sphi 0, %s31
      %s53 = sphi 0, %s55
      %s56 = sphi 0, %s53
      %s57 = sphi 0, %s56
      %s73 = sphi 0, %s57
      %s79 = sphi 0, %s81
      %s82 = sphi 0, %s79
      %s83 = sphi 0, %s82
      %s99 = sphi 0, %s83
    $region4: #{tpu_custom_call.1} parent=1 // loop_header_branch
      %20 = sbr.rel (%p18) target = $region8
    $region5: #{tpu_custom_call.1} parent=1 // loop_body
      %s22 = ssub.s32 %s17, 1
      %s23 = ssub.s32 %s17, 2
      %s24 = sadd.s32 %s17, 1
      %s25 = ssub.s32 %s17, %s24
      %p26 = scmp.eq.s32.totalorder %s25, 0
      %s28 = sadd.s32 %s27, 1
      %s29 = scalar_select %p26, %s27, %s28
      %p32 = pneg %p26
      %p33 = scmp.eq.s32.totalorder %s17, 1
      %p34 = por %p32, %p33
      %p35 = scmp.ne.s32.totalorder %s27, %s30
      %p36 = scmp.eq.s32.totalorder %s17, 0
      %p37 = por %p35, %p36
      %p38 = scmp.ne.s32.totalorder %s27, %s30
      %p39 = scmp.eq.s32.totalorder %s22, 1
      %p40 = por %p38, %p39
      %p41 = scmp.ne.s32.totalorder %s30, %s31
      %p42 = scmp.eq.s32.totalorder %s22, 0
      %p43 = por %p41, %p42
      %p44 = scmp.ne.s32.totalorder %s30, %s31
      %p45 = scmp.eq.s32.totalorder %s23, 1
      %p46 = por %p44, %p45
      %p48 = scmp.ne.s32.totalorder %s31, %s47
      %p49 = scmp.eq.s32.totalorder %s23, 0
      %p50 = por %p48, %p49
      %s51 = ssub.s32 %s17, %s24
      %p52 = scmp.eq.s32.totalorder %s51, 0
      %s54 = sadd.s32 %s53, 1
      %s55 = scalar_select %p52, %s53, %s54
      %p58 = pneg %p52
      %p59 = scmp.eq.s32.totalorder %s17, 1
      %p60 = por %p58, %p59
      %p61 = scmp.ne.s32.totalorder %s53, %s56
      %p62 = scmp.eq.s32.totalorder %s17, 0
      %p63 = por %p61, %p62
      %p64 = scmp.ne.s32.totalorder %s53, %s56
      %p65 = scmp.eq.s32.totalorder %s22, 1
      %p66 = por %p64, %p65
      %p67 = scmp.ne.s32.totalorder %s56, %s57
      %p68 = scmp.eq.s32.totalorder %s22, 0
      %p69 = por %p67, %p68
      %p70 = scmp.ne.s32.totalorder %s56, %s57
      %p71 = scmp.eq.s32.totalorder %s23, 1
      %p72 = por %p70, %p71
      %p74 = scmp.ne.s32.totalorder %s57, %s73
      %p75 = scmp.eq.s32.totalorder %s23, 0
      %p76 = por %p74, %p75
      %s77 = ssub.s32 %s17, %s24
      %p78 = scmp.eq.s32.totalorder %s77, 0
      %s80 = sadd.s32 %s79, 1
      %s81 = scalar_select %p78, %s79, %s80
      %p84 = pneg %p78
      %p85 = scmp.eq.s32.totalorder %s17, 1
      %p86 = por %p84, %p85
      %p87 = scmp.ne.s32.totalorder %s79, %s82
      %p88 = scmp.eq.s32.totalorder %s17, 0
      %p89 = por %p87, %p88
      %p90 = scmp.ne.s32.totalorder %s79, %s82
      %p91 = scmp.eq.s32.totalorder %s22, 1
      %p92 = por %p90, %p91
      %p93 = scmp.ne.s32.totalorder %s82, %s83
      %p94 = scmp.eq.s32.totalorder %s22, 0
      %p95 = por %p93, %p94
      %p96 = scmp.ne.s32.totalorder %s82, %s83
      %p97 = scmp.eq.s32.totalorder %s23, 1
      %p98 = por %p96, %p97
      %p100 = scmp.ne.s32.totalorder %s83, %s99
      %p101 = scmp.eq.s32.totalorder %s23, 0
      %p102 = por %p100, %p101
      %p103 = scmp.le.s32.totalorder 1, %s17
      %p104 = scmp.lt.s32.totalorder %s17, 3
      %p105 = pnand %p103, %p104
      %p106 = pneg %p105
      // Predicated region
      $region9: #{tpu_custom_call.1} parent=5 // pred_check
        _
      $region10: #{tpu_custom_call.1} parent=5 // pred_check_branch
        %108 = sbr.rel (%p105) target = $region12
      $region11: #{tpu_custom_call.1} parent=5 // pred_region
        %s109 = ssub.s32 %s17, 1
      $region12: #{tpu_custom_call.1} parent=5 // pred_fallthru
        _
      %p110 = scmp.lt.s32.totalorder %s17, 2
      // Predicated region
      $region13: #{tpu_custom_call.1} parent=5 // pred_check
        %p111 = pneg %p110
      $region14: #{tpu_custom_call.1} parent=5 // pred_check_branch
        %113 = sbr.rel (%p111) target = $region16
      $region15: #{tpu_custom_call.1} parent=5 // pred_region
        // Predicated region
        $region17: #{tpu_custom_call.1} parent=15 // pred_check
          %p114 = pneg %p37
        $region18: #{tpu_custom_call.1} parent=15 // pred_check_branch
          %116 = sbr.rel (%p114) target = $region20
        $region19: #{tpu_custom_call.1} parent=15 // pred_region
          %s117 = sand.u32 %s27, 1
          %s118 = scalar_lea.sflag [#allocation4], %s117
          %s119 = sand.u32 %s27, 1
          %s120 = smul.addr %s119, 8
          %s121 = scalar_lea.vmem [#allocation3], %s120
          %s123 = ssub.s32 128, 128
          %124 = vsyncadd %s118, %s123
          %s125 = smul.addr %s17, 128
          %s126 = scalar_lea.hbm %s0, %s125
          %s128 = sshll.u32 %s121, 4
          %s129 = int_to_ptr.vmem [resolvable:$true] %s128
          %131 = dma.hbm_to_vmem [thread:$0]  %s126, 128, %s129, %s118
        $region20: #{tpu_custom_call.1} parent=15 // pred_fallthru
          _
        // Predicated region
        $region21: #{tpu_custom_call.1} parent=15 // pred_check
          %p132 = pneg %p63
        $region22: #{tpu_custom_call.1} parent=15 // pred_check_branch
          %134 = sbr.rel (%p132) target = $region24
        $region23: #{tpu_custom_call.1} parent=15 // pred_region
          %s135 = sand.u32 %s53, 1
          %s136 = scalar_lea.sflag [#allocation7], %s135
          %s137 = sand.u32 %s53, 1
          %s138 = smul.addr %s137, 8
          %s139 = scalar_lea.vmem [#allocation6], %s138
          %s141 = ssub.s32 128, 128
          %142 = vsyncadd %s136, %s141
          %s143 = smul.addr %s17, 128
          %s144 = scalar_lea.hbm %s1, %s143
          %s146 = sshll.u32 %s139, 4
          %s147 = int_to_ptr.vmem [resolvable:$true] %s146
          %149 = dma.hbm_to_vmem [thread:$0]  %s144, 128, %s147, %s136
        $region24: #{tpu_custom_call.1} parent=15 // pred_fallthru
          _
      $region16: #{tpu_custom_call.1} parent=5 // pred_fallthru
        _
      %p150 = scmp.le.s32.totalorder 1, %s17
      %p151 = scmp.lt.s32.totalorder %s17, 3
      %p152 = pnand %p150, %p151
      %p153 = pneg %p152
      // Predicated region
      $region25: #{tpu_custom_call.1} parent=5 // pred_check
        _
      $region26: #{tpu_custom_call.1} parent=5 // pred_check_branch
        %155 = sbr.rel (%p152) target = $region28
      $region27: #{tpu_custom_call.1} parent=5 // pred_region
        %s156 = ssub.s32 %s17, 1
        %s157 = sand.u32 %s30, 1
        %s158 = scalar_lea.sflag [#allocation4], %s157
        %s159 = sand.u32 %s30, 1
        %s160 = smul.addr %s159, 8
        %s161 = scalar_lea.vmem [#allocation3], %s160
        // Predicated region
        $region29: #{tpu_custom_call.1} parent=27 // pred_check
          %p162 = pneg %p43
        $region30: #{tpu_custom_call.1} parent=27 // pred_check_branch
          %164 = sbr.rel (%p162) target = $region32
        $region31: #{tpu_custom_call.1} parent=27 // pred_region
          %165 = dma.done %s158, 128
        $region32: #{tpu_custom_call.1} parent=27 // pred_fallthru
          _
        %s166 = sand.u32 %s56, 1
        %s167 = scalar_lea.sflag [#allocation7], %s166
        %s168 = sand.u32 %s56, 1
        %s169 = smul.addr %s168, 8
        %s170 = scalar_lea.vmem [#allocation6], %s169
        // Predicated region
        $region33: #{tpu_custom_call.1} parent=27 // pred_check
          %p171 = pneg %p69
        $region34: #{tpu_custom_call.1} parent=27 // pred_check_branch
          %173 = sbr.rel (%p171) target = $region36
        $region35: #{tpu_custom_call.1} parent=27 // pred_region
          %174 = dma.done %s167, 128
        $region36: #{tpu_custom_call.1} parent=27 // pred_fallthru
          _
        %s175 = sand.u32 %s30, 1
        %s176 = scalar_lea.sflag [#allocation4], %s175
        %s177 = sand.u32 %s30, 1
        %s178 = smul.addr %s177, 8
        %s179 = scalar_lea.vmem [#allocation3], %s178
        %p180 = pneg %p43
        %p181 = pneg %p40
        %s182 = sand.u32 %s56, 1
        %s183 = scalar_lea.sflag [#allocation7], %s182
        %s184 = sand.u32 %s56, 1
        %s185 = smul.addr %s184, 8
        %s186 = scalar_lea.vmem [#allocation6], %s185
        %p187 = pneg %p69
        %p188 = pneg %p66
        %p189 = pneg %p95
        %p190 = pneg %p92
        %s191 = sand.u32 %s82, 1
        %s192 = scalar_lea.sflag [#allocation5], %s191
        %s193 = sand.u32 %s82, 1
        %s194 = smul.addr %s193, 8
        %s195 = scalar_lea.vmem [#allocation8], %s194
        %196 = vst [vmem:[#allocation2] sm:$0xff] 0.0
        %197 = vst [vmem:[#allocation2 + $0x8] sm:$0xff] 0.0
        %198 = vst [vmem:[#allocation2 + $0x10] sm:$0xff] 0.0
        %199 = vst [vmem:[#allocation2 + $0x18] sm:$0xff] 0.0
        %200 = vst [vmem:[#allocation2 + $0x20] sm:$0xff] 0.0
        %v201 = vld [vmem:[#allocation2] sm:$0xff]
        %202 = vadd.xlane.f32.xlu0 %v201
        %v203 = vpop.xlane.xlu0 %202
        %v204 = vrot.slane %v203, 4
        %v205 = vadd.f32 %v203, %v204
        %v206 = vrot.slane %v205, 2
        %v207 = vadd.f32 %v205, %v206
        %v208 = vrot.slane %v207, 1
        %v209 = vadd.f32 %v207, %v208
        %s210 = vtos %v209
        %s211 = scalar_lea.vmem [#allocation2], 8
        %v212 = vld [vmem:[%s211] sm:$0xff]
        %213 = vadd.xlane.f32.xlu0 %v212
        %v214 = vpop.xlane.xlu0 %213
        %v215 = vrot.slane %v214, 4
        %v216 = vadd.f32 %v214, %v215
        %v217 = vrot.slane %v216, 2
        %v218 = vadd.f32 %v216, %v217
        %v219 = vrot.slane %v218, 1
        %v220 = vadd.f32 %v218, %v219
        %s221 = vtos %v220
        %s222 = scalar_lea.vmem [#allocation2], 16
        %v223 = vld [vmem:[%s222] sm:$0xff]
        %224 = vadd.xlane.f32.xlu0 %v223
        %v225 = vpop.xlane.xlu0 %224
        %v226 = vrot.slane %v225, 4
        %v227 = vadd.f32 %v225, %v226
        %v228 = vrot.slane %v227, 2
        %v229 = vadd.f32 %v227, %v228
        %v230 = vrot.slane %v229, 1
        %v231 = vadd.f32 %v229, %v230
        %s232 = vtos %v231
        %s233 = scalar_lea.vmem [#allocation2], 24
        %v234 = vld [vmem:[%s233] sm:$0xff]
        %235 = vadd.xlane.f32.xlu0 %v234
        %v236 = vpop.xlane.xlu0 %235
        %v237 = vrot.slane %v236, 4
        %v238 = vadd.f32 %v236, %v237
        %v239 = vrot.slane %v238, 2
        %v240 = vadd.f32 %v238, %v239
        %v241 = vrot.slane %v240, 1
        %v242 = vadd.f32 %v240, %v241
        %s243 = vtos %v242
        %s244 = scalar_lea.vmem [#allocation2], 32
        %v245 = vld [vmem:[%s244] sm:$0xff]
        %246 = vadd.xlane.f32.xlu0 %v245
        %v247 = vpop.xlane.xlu0 %246
        %v248 = vrot.slane %v247, 4
        %v249 = vadd.f32 %v247, %v248
        %v250 = vrot.slane %v249, 2
        %v251 = vadd.f32 %v249, %v250
        %v252 = vrot.slane %v251, 1
        %v253 = vadd.f32 %v251, %v252
        %s254 = vtos %v253
        %v255 = vld [vmem:[%s161] sm:$0xff]
        %v256 = vld [vmem:[%s170] sm:$0xff]
        %vm257 = vcmp.gt.f32.partialorder %v256, 0.0
        %v258 = vsel %vm257, %v255, 0.0
        %v259 = vrcp.pop %v256
        %v260 = vmul.f32 1.0, %v259
        %v261 = vsel %vm257, %v260, 0.0
        %v262 = vsel %vm257, 1.0, 0.0
        %v263 = vmul.f32 %v258, %v258
        %264 = vadd.xlane.f32.xlu0 %v263
        %v265 = vpop.xlane.xlu0 %264
        %v266 = vrot.slane %v265, 4
        %v267 = vadd.f32 %v265, %v266
        %v268 = vrot.slane %v267, 2
        %v269 = vadd.f32 %v267, %v268
        %v270 = vrot.slane %v269, 1
        %v271 = vadd.f32 %v269, %v270
        %s272 = vtos %v271
        %s273 = sadd.f32 %s210, %s272
        %274 = vadd.xlane.f32.xlu0 %v258
        %v275 = vpop.xlane.xlu0 %274
        %v276 = vrot.slane %v275, 4
        %v277 = vadd.f32 %v275, %v276
        %v278 = vrot.slane %v277, 2
        %v279 = vadd.f32 %v277, %v278
        %v280 = vrot.slane %v279, 1
        %v281 = vadd.f32 %v279, %v280
        %s282 = vtos %v281
        %s283 = sadd.f32 %s221, %s282
        %284 = vadd.xlane.f32.xlu0 %v262
        %v285 = vpop.xlane.xlu0 %284
        %v286 = vrot.slane %v285, 4
        %v287 = vadd.f32 %v285, %v286
        %v288 = vrot.slane %v287, 2
        %v289 = vadd.f32 %v287, %v288
        %v290 = vrot.slane %v289, 1
        %v291 = vadd.f32 %v289, %v290
        %s292 = vtos %v291
        %s293 = sadd.f32 %s232, %s292
        %v294 = vmul.f32 %v258, %v261
        %295 = vadd.xlane.f32.xlu0 %v294
        %v296 = vpop.xlane.xlu0 %295
        %v297 = vrot.slane %v296, 4
        %v298 = vadd.f32 %v296, %v297
        %v299 = vrot.slane %v298, 2
        %v300 = vadd.f32 %v298, %v299
        %v301 = vrot.slane %v300, 1
        %v302 = vadd.f32 %v300, %v301
        %s303 = vtos %v302
        %s304 = sadd.f32 %s243, %s303
        %305 = vadd.xlane.f32.xlu0 %v261
        %v306 = vpop.xlane.xlu0 %305
        %v307 = vrot.slane %v306, 4
        %v308 = vadd.f32 %v306, %v307
        %v309 = vrot.slane %v308, 2
        %v310 = vadd.f32 %v308, %v309
        %v311 = vrot.slane %v310, 1
        %v312 = vadd.f32 %v310, %v311
        %s313 = vtos %v312
        %s314 = sadd.f32 %s254, %s313
        %s315 = smul.f32 %s273, %s293
        %s316 = smul.f32 %s283, %s283
        %s317 = ssub.f32 %s315, %s316
        %p318 = scmp.ne.f32.partialorder %s317, 0.0
        %s319 = scalar_select %p318, %s317, 1.0
        %s320 = smul.f32 %s293, %s304
        %s321 = smul.f32 %s283, %s314
        %s322 = ssub.f32 %s320, %s321
        %v323 = vstv %s319
        %v324 = vrcp.pop %v323
        %s325 = vtos %v324
        %s326 = smul.f32 %s322, %s325
        %s327 = scalar_select %p318, %s326, 0.0
        %s328 = ssub.f32 0.0, %s283
        %s329 = smul.f32 %s328, %s304
        %s330 = smul.f32 %s273, %s314
        %s331 = sadd.f32 %s329, %s330
        %v332 = vstv %s319
        %v333 = vrcp.pop %v332
        %s334 = vtos %v333
        %s335 = smul.f32 %s331, %s334
        %s336 = scalar_select %p318, %s335, 0.0
        %v337 = vstv %s327
        %v338 = vmul.f32 %v337, %v255
        %v339 = vstv %s336
        %v340 = vadd.f32 %v338, %v339
        %v341 = vmax.f32 %v340, 0.0125
        %v342 = vrcp.pop %v341
        %v343 = vmul.f32 1.0, %v342
        %344 = vst [vmem:[%s195] sm:$0xff] %v343
        %s345 = sand.u32 %s82, 1
        %s346 = scalar_lea.sflag [#allocation5], %s345
        %s347 = sand.u32 %s82, 1
        %s348 = smul.addr %s347, 8
        %s349 = scalar_lea.vmem [#allocation8], %s348
        // Predicated region
        $region37: #{tpu_custom_call.1} parent=27 // pred_check
          %p350 = pneg %p92
        $region38: #{tpu_custom_call.1} parent=27 // pred_check_branch
          %352 = sbr.rel (%p350) target = $region40
        $region39: #{tpu_custom_call.1} parent=27 // pred_region
          %s354 = ssub.s32 128, 128
          %355 = vsyncadd %s346, %s354
          %s356 = smul.addr %s22, 128
          %s357 = scalar_lea.hbm %s2, %s356
          %s359 = sshll.u32 %s349, 4
          %s360 = int_to_ptr.vmem [resolvable:$true] %s359
          %362 = dma.vmem_to_hbm [thread:$0]  %s360, 128, %s357, %s346
        $region40: #{tpu_custom_call.1} parent=27 // pred_fallthru
          _
      $region28: #{tpu_custom_call.1} parent=5 // pred_fallthru
        _
      %p363 = scmp.le.s32.totalorder 2, %s17
      // Predicated region
      $region41: #{tpu_custom_call.1} parent=5 // pred_check
        %p364 = pneg %p363
      $region42: #{tpu_custom_call.1} parent=5 // pred_check_branch
        %366 = sbr.rel (%p364) target = $region44
      $region43: #{tpu_custom_call.1} parent=5 // pred_region
        %s367 = ssub.s32 %s17, 2
        // Predicated region
        $region45: #{tpu_custom_call.1} parent=43 // pred_check
          %p368 = pneg %p98
        $region46: #{tpu_custom_call.1} parent=43 // pred_check_branch
          %370 = sbr.rel (%p368) target = $region48
        $region47: #{tpu_custom_call.1} parent=43 // pred_region
          %s371 = sand.u32 %s83, 1
          %s372 = scalar_lea.sflag [#allocation5], %s371
          %s373 = sand.u32 %s83, 1
          %s374 = smul.addr %s373, 8
          %s375 = scalar_lea.vmem [#allocation8], %s374
          %376 = dma.done %s372, 128
        $region48: #{tpu_custom_call.1} parent=43 // pred_fallthru
          _
      $region44: #{tpu_custom_call.1} parent=5 // pred_fallthru
        _
    $region6: #{tpu_custom_call.1} parent=1 // loop_footer
      %s21 = sadd.s32 1, %s17
    $region7: #{tpu_custom_call.1} parent=1 // loop_footer_branch
      %16 = sbr.rel target = $region3
    $region8: #{tpu_custom_call.1} parent=1 // loop_exit
      _
    %377 = vsyncpa [#allocation4], 1
    %s378 = scalar_lea.sflag [#allocation4], 1
    %379 = vsyncpa %s378, 1
    %380 = vsyncpa [#allocation7], 1
    %s381 = scalar_lea.sflag [#allocation7], 1
    %382 = vsyncpa %s381, 1
    %383 = vsyncpa [#allocation5], 1
    %s384 = scalar_lea.sflag [#allocation5], 1
    %385 = vsyncpa %s384, 1

</llo_original>
